<compile_context>
chip_gen: v7x
topology: tpu7x:2x2x1
jax: 0.10.0
libtpu: 0.0.40
codegen_flags: <defaults>
</compile_context>

<pallas_src>
import functools

import jax
import jax.numpy as jnp
from jax.experimental import pallas as pl
from jax.experimental.pallas import tpu as pltpu


def _cdiv(a: int, b: int) -> int:
    return (a + b - 1) // b


def _round_up(x: int, m: int) -> int:
    return _cdiv(x, m) * m


def _largest_divisor_leq(n: int, cap: int) -> int:
    cap = max(1, min(n, cap))
    for d in range(cap, 0, -1):
        if n % d == 0:
            return d
    return 1


def _vmem_limit_bytes() -> int:
    """Per-generation scoped-VMEM limit with headroom for compiler scratch."""
    try:
        phys = int(pltpu.get_tpu_info().vmem_capacity_bytes)
    except Exception:  # pragma: no cover - conservative fallback (safe on v7x too)
        phys = 64 * 1024 * 1024
    return max(32 * 1024 * 1024, min(phys - 16 * 1024 * 1024, 100 * 1024 * 1024))


def _pick_batch_block(batch: int, c_in: int, c_out: int, n_len: int, m: int, m_pad: int,
                      compute_itemsize: int, vmem_limit: int, target_rows: int) -> int:
    """Batch block BB: fill MXU rows (BB*C_in and BB*C_out >= target_rows) without exceeding
    the VMEM budget, always an exact divisor of `batch` (no silent blow-up / no batch pad),
    and keep >= 2 grid steps when batch > 1 so both v7x TensorCores get work."""
    want = max(1, _cdiv(target_rows, max(1, min(c_in, c_out))))
    want = min(want, batch)
    if batch > 1:
        want = min(want, max(1, batch // 2))

    def vmem_bytes(bb: int) -> int:
        dbuf = 2  # double-buffered pipeline blocks
        blocks = dbuf * (bb * c_in * n_len * 4          # x block (f32 in HBM)
                         + 2 * bb * c_out * c_in * m * 4  # w_real + w_imag blocks
                         + bb * c_out * n_len * 4)        # output block
        bases = n_len * 2 * m_pad * compute_itemsize + 2 * m_pad * n_len * 4
        scratch = bb * (c_in + c_out) * 2 * m_pad * 4
        interm = bb * c_in * max(n_len * compute_itemsize, 2 * m_pad * 4) \
            + bb * c_out * n_len * 4
        return blocks + 2 * bases + scratch + interm

    while want > 1 and vmem_bytes(want) > int(0.6 * vmem_limit):
        want -= 1
    for cand in range(want, 0, -1):
        if batch % cand == 0:
            return cand
    return 1


def _dft_bases(n_len: int, m: int, m_pad: int, f_dtype):
    """Fused truncated-DFT matrices.

    f : (N, 2*M_pad)   cols [0:M) = cos(2*pi*n*k/N), cols [M_pad:M_pad+M) = -sin(...)
    c : (2*M_pad, N)   rows [0:M) = scale_k*cos,     rows [M_pad:M_pad+M) = -scale_k*sin
    torch.fft.irfft semantics: scale = 1/N for DC and (even-N) Nyquist, 2/N otherwise,
    imaginary parts of DC/Nyquist ignored.  Padded rows/cols are zero so garbage in the
    padded accumulator lanes can never leak into the output.  c stays f32 (carries scales).
    """
    n = jnp.arange(n_len, dtype=jnp.float32)
    k = jnp.arange(m, dtype=jnp.float32)
    ang = 2.0 * jnp.pi * n[:, None] * k[None, :] / n_len          # (N, M)

    f = jnp.zeros((n_len, 2 * m_pad), jnp.float32)
    f = f.at[:, :m].set(jnp.cos(ang))
    f = f.at[:, m_pad:m_pad + m].set(-jnp.sin(ang))

    scale = jnp.full((m,), 2.0 / n_len, jnp.float32).at[0].set(1.0 / n_len)
    has_nyquist = (n_len % 2 == 0) and (m == n_len // 2 + 1)
    if has_nyquist:
        scale = scale.at[m - 1].set(1.0 / n_len)
    cr = scale[:, None] * jnp.cos(ang.T)                          # (M, N)
    ci = -scale[:, None] * jnp.sin(ang.T)
    ci = ci.at[0, :].set(0.0)                                     # imag of DC ignored
    if has_nyquist:
        ci = ci.at[m - 1, :].set(0.0)                             # imag of Nyquist ignored
    c = jnp.zeros((2 * m_pad, n_len), jnp.float32)
    c = c.at[:m, :].set(cr)
    c = c.at[m_pad:m_pad + m, :].set(ci)
    return f.astype(f_dtype), c


def _fourier_kernel(x_ref, wr_ref, wi_ref, f_ref, c_ref, o_ref, spec_ref, acc_ref, *,
                    bb: int, c_in: int, c_out: int, m: int, m_pad: int,
                    jt: int, co_t: int):
    """One batch block.

    x_ref  : (BB, C_in, N)            input signals (source dtype; cast for the MXU)
    wr/wi  : (BB, C_out, C_in, M)     spectral weights, native layout, unpadded, f32
    f_ref  : (N, 2*M_pad)             fused truncated-rfft basis (compute dtype)
    c_ref  : (2*M_pad, N)             fused truncated-irfft basis (f32, carries 1/N, 2/N)
    o_ref  : (BB, C_out, N)           output (f32)
    spec_ref : VMEM (BB, C_in, 2*M_pad)  f32  rfft spectrum, [real | imag] lane halves
    acc_ref  : VMEM (BB, C_out, 2*M_pad) f32  mixed spectrum, [real | imag] lane halves
    """
    n_len = x_ref.shape[-1]

    # ---- 1) Truncated rfft: ONE fused MXU matmul over all BB*C_in rows. ----
    x2d = x_ref[...].reshape(bb * c_in, n_len).astype(f_ref.dtype)
    spec = jnp.dot(x2d, f_ref[...], preferred_element_type=jnp.float32)
    spec_ref[...] = spec.reshape(bb, c_in, 2 * m_pad)

    # ---- 2) Zero the fused accumulator (padding lanes must be exactly 0). ----
    acc_ref[...] = jnp.zeros_like(acc_ref)

    # ---- 3) Spectral channel mix on the VPU, chunked to bound vreg live ranges. ----
    # out[b,l,k] = sum_j x[b,j,k] * W[b,l,j,k]   (complex multiply-accumulate)
    for ci in range(c_out // co_t):
        co0 = ci * co_t
        acc_r = jnp.zeros((bb, co_t, m), jnp.float32)
        acc_i = jnp.zeros((bb, co_t, m), jnp.float32)
        for qi in range(c_in // jt):
            j0 = qi * jt
            xr = spec_ref[:, j0:j0 + jt, 0:m][:, None, :, :]               # (BB,1,JT,M)
            xi = spec_ref[:, j0:j0 + jt, m_pad:m_pad + m][:, None, :, :]   # (BB,1,JT,M)
            wr = wr_ref[:, co0:co0 + co_t, j0:j0 + jt, :]                  # (BB,CO_T,JT,M)
            wi = wi_ref[:, co0:co0 + co_t, j0:j0 + jt, :]
            acc_r = acc_r + jnp.sum(xr * wr - xi * wi, axis=2)
            acc_i = acc_i + jnp.sum(xr * wi + xi * wr, axis=2)
        acc_ref[:, co0:co0 + co_t, 0:m] = acc_r
        acc_ref[:, co0:co0 + co_t, m_pad:m_pad + m] = acc_i

    # ---- 4) Truncated irfft: ONE fused MXU matmul on the [real | imag] spectrum (f32). ----
    y = jnp.dot(acc_ref[...].reshape(bb * c_out, 2 * m_pad), c_ref[...],
                preferred_element_type=jnp.float32)
    o_ref[...] = y.reshape(bb, c_out, n_len).astype(o_ref.dtype)


@functools.partial(jax.jit, static_argnames=("modes1", "compute_dtype", "target_rows"))
def fourier_kernel_forward(x, w_real, w_imag, *, modes1: int,
                           compute_dtype=jnp.bfloat16, target_rows: int = 256):
    """Equivalent of FourierKernel.forward(x, weights) with weights = w_real + i*w_imag."""
    b, c_in, n_len = x.shape
    c_out = w_real.shape[1]
    m = modes1
    assert w_real.shape == (b, c_out, c_in, m) and w_imag.shape == w_real.shape
    assert 1 <= m <= n_len // 2 + 1

    compute_dtype = jnp.dtype(compute_dtype)
    m_pad = _round_up(m, 128)
    vmem_limit = _vmem_limit_bytes()
    bb = _pick_batch_block(b, c_in, c_out, n_len, m, m_pad, compute_dtype.itemsize,
                           vmem_limit, target_rows)
    assert b % bb == 0
    jt = _largest_divisor_leq(c_in, 8)
    co_cap = max(1, 32 // max(1, bb * _cdiv(m, 128)))   # keep mix temporaries in vregs
    co_t = _largest_divisor_leq(c_out, min(8, co_cap))

    w_real = w_real.astype(jnp.float32)
    w_imag = w_imag.astype(jnp.float32)
    f_basis, c_basis = _dft_bases(n_len, m, m_pad, compute_dtype)

    kernel = functools.partial(_fourier_kernel, bb=bb, c_in=c_in, c_out=c_out,
                               m=m, m_pad=m_pad, jt=jt, co_t=co_t)

    # Single-buffer the constant bases only when double-buffering them would waste real VMEM.
    basis_bytes = (f_basis.size * f_basis.dtype.itemsize + c_basis.size * 4)
    single_buffer_bases = basis_bytes > (2 << 20)

    def basis_spec(shape):
        if single_buffer_bases:
            return pl.BlockSpec(shape, lambda i: (0, 0), pipeline_mode=pl.Buffered(1))
        return pl.BlockSpec(shape, lambda i: (0, 0))

    grid_spec = pltpu.PrefetchScalarGridSpec(
        num_scalar_prefetch=0,
        grid=(b // bb,),
        in_specs=[
            pl.BlockSpec((bb, c_in, n_len), lambda i: (i, 0, 0)),            # x (native)
            pl.BlockSpec((bb, c_out, c_in, m), lambda i: (i, 0, 0, 0)),      # w_real (native)
            pl.BlockSpec((bb, c_out, c_in, m), lambda i: (i, 0, 0, 0)),      # w_imag (native)
            basis_spec((n_len, 2 * m_pad)),                                  # rfft basis
            basis_spec((2 * m_pad, n_len)),                                  # irfft basis
        ],
        out_specs=pl.BlockSpec((bb, c_out, n_len), lambda i: (i, 0, 0)),
        scratch_shapes=[
            pltpu.VMEM((bb, c_in, 2 * m_pad), jnp.float32),    # rfft spectrum
            pltpu.VMEM((bb, c_out, 2 * m_pad), jnp.float32),   # mixed spectrum accumulator
        ],
    )

    flops = (2 * b * c_in * n_len * 2 * m_pad          # rfft matmul
             + 8 * b * c_out * c_in * m                # complex channel mix
             + 2 * b * c_out * 2 * m_pad * n_len)      # irfft matmul
    bytes_accessed = (b * c_in * n_len * x.dtype.itemsize
                      + 2 * b * c_out * c_in * m * 4
                      + b * c_out * n_len * 4
                      + basis_bytes)

    out = pl.pallas_call(
        kernel,
        out_shape=jax.ShapeDtypeStruct((b, c_out, n_len), jnp.float32),
        grid_spec=grid_spec,
        compiler_params=pltpu.CompilerParams(
            dimension_semantics=("parallel",),
            vmem_limit_bytes=vmem_limit,
        ),
        cost_estimate=pl.CostEstimate(flops=flops, transcendentals=0,
                                      bytes_accessed=bytes_accessed),
    )(x, w_real, w_imag, f_basis, c_basis)
    return out


def _reference(x, w_real, w_imag, modes1):
    """Pure-JAX replica of the PyTorch forward (for verification)."""
    b, _, n_len = x.shape
    c_out = w_real.shape[1]
    weights = (w_real + 1j * w_imag).astype(jnp.complex64)
    x_ft = jnp.fft.rfft(x)
    out_ft = jnp.zeros((b, c_out, n_len // 2 + 1), dtype=jnp.complex64)
    out_ft = out_ft.at[:, :, :modes1].set(
        jnp.einsum("bjk,bljk->blk", x_ft[:, :, :modes1], weights)
    )
    return jnp.fft.irfft(out_ft, n=n_len)


if __name__ == "__main__":
    # Small shapes consistent with the module: batch=2, in=4, out=6, N=16, modes1=5.
    B, C_IN, C_OUT, N, MODES1 = 2, 4, 6, 16, 5

    key = jax.random.PRNGKey(0)
    kx, kr, ki, kx2, kr2, ki2 = jax.random.split(key, 6)
    x = jax.random.normal(kx, (B, C_IN, N), dtype=jnp.float32)
    w_real = 0.1 * jax.random.normal(kr, (B, C_OUT, C_IN, MODES1), dtype=jnp.float32)
    w_imag = 0.1 * jax.random.normal(ki, (B, C_OUT, C_IN, MODES1), dtype=jnp.float32)

    ref = _reference(x, w_real, w_imag, MODES1)

    # f32 compute path: tight tolerance against the FFT reference.
    out_f32 = fourier_kernel_forward(x, w_real, w_imag, modes1=MODES1,
                                     compute_dtype=jnp.float32)
    jax.block_until_ready(out_f32)
    assert out_f32.shape == (B, C_OUT, N)
    assert jnp.allclose(out_f32, ref, atol=1e-4, rtol=1e-4), \
        float(jnp.max(jnp.abs(out_f32 - ref)))

    # Default fast path: bf16 MXU inputs (x + rfft basis), f32 spectrum / irfft basis.
    out_bf16 = fourier_kernel_forward(x, w_real, w_imag, modes1=MODES1)
    jax.block_until_ready(out_bf16)
    assert out_bf16.shape == (B, C_OUT, N)
    assert float(jnp.max(jnp.abs(out_bf16 - ref))) < 1e-1

    # Odd channel/batch counts, N % 128 != 0, full spectrum incl. Nyquist (modes1 == N//2+1).
    B2, CI2, CO2, N2, M2 = 3, 3, 5, 20, 11
    x2 = jax.random.normal(kx2, (B2, CI2, N2), dtype=jnp.float32)
    wr2 = 0.1 * jax.random.normal(kr2, (B2, CO2, CI2, M2), dtype=jnp.float32)
    wi2 = 0.1 * jax.random.normal(ki2, (B2, CO2, CI2, M2), dtype=jnp.float32)
    ref2 = _reference(x2, wr2, wi2, M2)
    out2 = fourier_kernel_forward(x2, wr2, wi2, modes1=M2, compute_dtype=jnp.float32)
    jax.block_until_ready(out2)
    assert jnp.allclose(out2, ref2, atol=2e-3, rtol=2e-3), \
        float(jnp.max(jnp.abs(out2 - ref2)))

    print("KERNEL_OK")
</pallas_src>

<mosaic_0001>
module attributes {stable_mosaic.version = 11 : i64} {
  func.func @_fourier_kernel(%arg0: i32, %arg1: memref<1x4x16xf32, #tpu.memory_space<vmem>>, %arg2: memref<1x6x4x5xf32, #tpu.memory_space<vmem>>, %arg3: memref<1x6x4x5xf32, #tpu.memory_space<vmem>>, %arg4: memref<16x256xf32, #tpu.memory_space<vmem>>, %arg5: memref<256x16xf32, #tpu.memory_space<vmem>>, %arg6: memref<1x6x16xf32, #tpu.memory_space<vmem>>, %arg7: memref<1x4x256xf32, #tpu.memory_space<vmem>>, %arg8: memref<1x6x256xf32, #tpu.memory_space<vmem>>) attributes {dimension_semantics = [#tpu.dimension_semantics<parallel>], iteration_bounds = array<i64: 2>, scalar_prefetch = 0 : i64, scratch_operands = 2 : i64, tpu.core_type = #tpu.core_type<tc>, window_params = [{transform_indices = @transform_0, window_bounds = array<i64: 1, 4, 16>}, {transform_indices = @transform_1, window_bounds = array<i64: 1, 6, 4, 5>}, {transform_indices = @transform_2, window_bounds = array<i64: 1, 6, 4, 5>}, {pipeline_mode = #tpu.pipeline_mode<synchronous>, transform_indices = @transform_3, window_bounds = array<i64: 16, 256>}, {pipeline_mode = #tpu.pipeline_mode<synchronous>, transform_indices = @transform_4, window_bounds = array<i64: 256, 16>}, {transform_indices = @transform_5, window_bounds = array<i64: 1, 6, 16>}]} {
    %c0 = arith.constant 0 : index
    %c0_0 = arith.constant 0 : index
    %c0_1 = arith.constant 0 : index
    %0 = vector.load %arg1[%c0, %c0_0, %c0_1] : memref<1x4x16xf32, #tpu.memory_space<vmem>>, vector<1x4x16xf32>
    %1 = vector.shape_cast %0 : vector<1x4x16xf32> to vector<4x16xf32>
    %c0_2 = arith.constant 0 : index
    %c0_3 = arith.constant 0 : index
    %2 = vector.load %arg4[%c0_2, %c0_3] : memref<16x256xf32, #tpu.memory_space<vmem>>, vector<16x256xf32>
    %cst = arith.constant dense<0.000000e+00> : vector<4x256xf32>
    %3 = tpu.matmul %1, %2, %cst {dimension_numbers = #tpu.dot_dimension_numbers<[1], [0], [0], [1], [0, 0, 1, 1], [], []>} : vector<4x16xf32>, vector<16x256xf32>, vector<4x256xf32> -> vector<4x256xf32>
    %4 = vector.shape_cast %3 : vector<4x256xf32> to vector<1x4x256xf32>
    %c0_4 = arith.constant 0 : index
    %c0_5 = arith.constant 0 : index
    %c0_6 = arith.constant 0 : index
    %5 = vector.load %arg7[%c0_4, %c0_5, %c0_6] : memref<1x4x256xf32, #tpu.memory_space<vmem>>, vector<1x4x256xf32>
    tpu.vector_store %arg7[%c0_4, %c0_5, %c0_6], %4 {strides = array<i32>} : memref<1x4x256xf32, #tpu.memory_space<vmem>>, vector<1x4x256xf32>,
    %cst_7 = arith.constant 0.000000e+00 : f32
    %6 = vector.broadcast %cst_7 : f32 to vector<1x6x256xf32>
    %c0_8 = arith.constant 0 : index
    %c0_9 = arith.constant 0 : index
    %c0_10 = arith.constant 0 : index
    %7 = vector.load %arg8[%c0_8, %c0_9, %c0_10] : memref<1x6x256xf32, #tpu.memory_space<vmem>>, vector<1x6x256xf32>
    tpu.vector_store %arg8[%c0_8, %c0_9, %c0_10], %6 {strides = array<i32>} : memref<1x6x256xf32, #tpu.memory_space<vmem>>, vector<1x6x256xf32>,
    %cst_11 = arith.constant 0.000000e+00 : f32
    %8 = vector.broadcast %cst_11 : f32 to vector<1x6x5xf32>
    %cst_12 = arith.constant 0.000000e+00 : f32
    %9 = vector.broadcast %cst_12 : f32 to vector<1x6x5xf32>
    %c0_13 = arith.constant 0 : index
    %c0_14 = arith.constant 0 : index
    %c0_15 = arith.constant 0 : index
    %10 = vector.load %arg7[%c0_13, %c0_14, %c0_15] : memref<1x4x256xf32, #tpu.memory_space<vmem>>, vector<1x4x5xf32>
    %11 = vector.shape_cast %10 : vector<1x4x5xf32> to vector<1x1x4x5xf32>
    %c0_16 = arith.constant 0 : index
    %c0_17 = arith.constant 0 : index
    %c128 = arith.constant 128 : index
    %12 = vector.load %arg7[%c0_16, %c0_17, %c128] : memref<1x4x256xf32, #tpu.memory_space<vmem>>, vector<1x4x5xf32>
    %13 = vector.shape_cast %12 : vector<1x4x5xf32> to vector<1x1x4x5xf32>
    %c0_18 = arith.constant 0 : index
    %c0_19 = arith.constant 0 : index
    %c0_20 = arith.constant 0 : index
    %c0_21 = arith.constant 0 : index
    %14 = vector.load %arg2[%c0_18, %c0_19, %c0_20, %c0_21] : memref<1x6x4x5xf32, #tpu.memory_space<vmem>>, vector<1x6x4x5xf32>
    %c0_22 = arith.constant 0 : index
    %c0_23 = arith.constant 0 : index
    %c0_24 = arith.constant 0 : index
    %c0_25 = arith.constant 0 : index
    %15 = vector.load %arg3[%c0_22, %c0_23, %c0_24, %c0_25] : memref<1x6x4x5xf32, #tpu.memory_space<vmem>>, vector<1x6x4x5xf32>
    %16 = vector.broadcast %11 : vector<1x1x4x5xf32> to vector<1x6x4x5xf32>
    %17 = arith.mulf %16, %14 : vector<1x6x4x5xf32>
    %18 = vector.broadcast %13 : vector<1x1x4x5xf32> to vector<1x6x4x5xf32>
    %19 = arith.mulf %18, %15 : vector<1x6x4x5xf32>
    %20 = arith.subf %17, %19 : vector<1x6x4x5xf32>
    %cst_26 = arith.constant dense<0.000000e+00> : vector<1x6x5xf32>
    %21 = vector.multi_reduction <add>, %20, %cst_26 [2] : vector<1x6x4x5xf32> to vector<1x6x5xf32>
    %22 = arith.addf %8, %21 : vector<1x6x5xf32>
    %23 = vector.broadcast %11 : vector<1x1x4x5xf32> to vector<1x6x4x5xf32>
    %24 = arith.mulf %23, %15 : vector<1x6x4x5xf32>
    %25 = vector.broadcast %13 : vector<1x1x4x5xf32> to vector<1x6x4x5xf32>
    %26 = arith.mulf %25, %14 : vector<1x6x4x5xf32>
    %27 = arith.addf %24, %26 : vector<1x6x4x5xf32>
    %cst_27 = arith.constant dense<0.000000e+00> : vector<1x6x5xf32>
    %28 = vector.multi_reduction <add>, %27, %cst_27 [2] : vector<1x6x4x5xf32> to vector<1x6x5xf32>
    %29 = arith.addf %9, %28 : vector<1x6x5xf32>
    %c0_28 = arith.constant 0 : index
    %c0_29 = arith.constant 0 : index
    %c0_30 = arith.constant 0 : index
    %30 = vector.load %arg8[%c0_28, %c0_29, %c0_30] : memref<1x6x256xf32, #tpu.memory_space<vmem>>, vector<1x6x5xf32>
    tpu.vector_store %arg8[%c0_28, %c0_29, %c0_30], %22 {strides = array<i32>} : memref<1x6x256xf32, #tpu.memory_space<vmem>>, vector<1x6x5xf32>,
    %c0_31 = arith.constant 0 : index
    %c0_32 = arith.constant 0 : index
    %c128_33 = arith.constant 128 : index
    %31 = vector.load %arg8[%c0_31, %c0_32, %c128_33] : memref<1x6x256xf32, #tpu.memory_space<vmem>>, vector<1x6x5xf32>
    tpu.vector_store %arg8[%c0_31, %c0_32, %c128_33], %29 {strides = array<i32>} : memref<1x6x256xf32, #tpu.memory_space<vmem>>, vector<1x6x5xf32>,
    %c0_34 = arith.constant 0 : index
    %c0_35 = arith.constant 0 : index
    %c0_36 = arith.constant 0 : index
    %32 = vector.load %arg8[%c0_34, %c0_35, %c0_36] : memref<1x6x256xf32, #tpu.memory_space<vmem>>, vector<1x6x256xf32>
    %33 = vector.shape_cast %32 : vector<1x6x256xf32> to vector<6x256xf32>
    %c0_37 = arith.constant 0 : index
    %c0_38 = arith.constant 0 : index
    %34 = vector.load %arg5[%c0_37, %c0_38] : memref<256x16xf32, #tpu.memory_space<vmem>>, vector<256x16xf32>
    %cst_39 = arith.constant dense<0.000000e+00> : vector<6x16xf32>
    %35 = tpu.matmul %33, %34, %cst_39 {dimension_numbers = #tpu.dot_dimension_numbers<[1], [0], [0], [1], [0, 0, 1, 1], [], []>} : vector<6x256xf32>, vector<256x16xf32>, vector<6x16xf32> -> vector<6x16xf32>
    %36 = vector.shape_cast %35 : vector<6x16xf32> to vector<1x6x16xf32>
    %c0_40 = arith.constant 0 : index
    %c0_41 = arith.constant 0 : index
    %c0_42 = arith.constant 0 : index
    %37 = vector.load %arg6[%c0_40, %c0_41, %c0_42] : memref<1x6x16xf32, #tpu.memory_space<vmem>>, vector<1x6x16xf32>
    tpu.vector_store %arg6[%c0_40, %c0_41, %c0_42], %36 {strides = array<i32>} : memref<1x6x16xf32, #tpu.memory_space<vmem>>, vector<1x6x16xf32>,
    return
  }
  func.func @transform_0(%arg0: i32) -> (i32, i32, i32) {
    %c0_i32 = arith.constant 0 : i32
    %c0_i32_0 = arith.constant 0 : i32
    %c0_i32_1 = arith.constant 0 : i32
    return %arg0, %c0_i32, %c0_i32_0 : i32, i32, i32
  }
  func.func @transform_1(%arg0: i32) -> (i32, i32, i32, i32) {
    %c0_i32 = arith.constant 0 : i32
    %c0_i32_0 = arith.constant 0 : i32
    %c0_i32_1 = arith.constant 0 : i32
    %c0_i32_2 = arith.constant 0 : i32
    return %arg0, %c0_i32, %c0_i32_0, %c0_i32_1 : i32, i32, i32, i32
  }
  func.func @transform_2(%arg0: i32) -> (i32, i32, i32, i32) {
    %c0_i32 = arith.constant 0 : i32
    %c0_i32_0 = arith.constant 0 : i32
    %c0_i32_1 = arith.constant 0 : i32
    %c0_i32_2 = arith.constant 0 : i32
    return %arg0, %c0_i32, %c0_i32_0, %c0_i32_1 : i32, i32, i32, i32
  }
  func.func @transform_3(%arg0: i32) -> (i32, i32) {
    %c0_i32 = arith.constant 0 : i32
    %c0_i32_0 = arith.constant 0 : i32
    %c0_i32_1 = arith.constant 0 : i32
    return %c0_i32, %c0_i32_0 : i32, i32
  }
  func.func @transform_4(%arg0: i32) -> (i32, i32) {
    %c0_i32 = arith.constant 0 : i32
    %c0_i32_0 = arith.constant 0 : i32
    %c0_i32_1 = arith.constant 0 : i32
    return %c0_i32, %c0_i32_0 : i32, i32
  }
  func.func @transform_5(%arg0: i32) -> (i32, i32, i32) {
    %c0_i32 = arith.constant 0 : i32
    %c0_i32_0 = arith.constant 0 : i32
    %c0_i32_1 = arith.constant 0 : i32
    return %arg0, %c0_i32, %c0_i32_0 : i32, i32, i32
  }
}

</mosaic_0001>

<llo_original>
// kernel: fourier_kernel_forward.1
$region0: #{fourier_kernel_forward.1}
  #allocation0 [shape = 'u32[]', space=smem, size = 0x4, offset = 0x4, fixed_abs, tag = 'smem constant byte address 0x4 - core index']
  #allocation1 [shape = 'u32[144,128]{1,0:T(1,128)}', space=vmem, size = 0x12000, scoped, tag = 'internal scratch']
  #allocation2 [shape = 'f32[1,4,256]{2,1,0:T(4,128)}', space=vmem, size = 0x1000, scoped, tag = 'scratch operand']
  #allocation3 [shape = 'f32[1,6,256]{2,1,0:T(8,128)}', space=vmem, size = 0x2000, scoped, tag = 'scratch operand']
  %s0 = inlined_call_operand.vmem [shape: f32[2,4,16], index: 0, kind: input, shape index: {}]
  %s1 = inlined_call_operand.vmem [shape: f32[2,6,4,5], index: 1, kind: input, shape index: {}]
  %s2 = inlined_call_operand.vmem [shape: f32[2,6,4,5], index: 2, kind: input, shape index: {}]
  %s3 = inlined_call_operand.vmem [shape: f32[16,256], index: 3, kind: input, shape index: {}]
  %s4 = inlined_call_operand.vmem [shape: f32[256,16], index: 4, kind: input, shape index: {}]
  %s5 = inlined_call_operand.vmem [shape: f32[2,6,16], index: 5, kind: output, shape index: {}]
  %s6 = sld [smem:[#allocation0]]
  $region53: #{fourier_kernel_forward.1} parent=0
    _
  %s8 = ssub.s32 1, %s6
  %s9 = scalar_select 0, %s8, %s6
  loop: start=0, step=1, limit=4
  $region2: #{fourier_kernel_forward.1} parent=0 // loop_pre_header
    _
  $region3: #{fourier_kernel_forward.1} parent=0 // loop_header
    %s11 = sphi 0, %s15
    %p12 = scmp.ge.s32.totalorder %s11, 4
    %s21 = sphi 0, %s23
    %s24 = sphi 0, %s21
    %s25 = sphi 0, %s24
    %s41 = sphi 0, %s25
    %s47 = sphi 0, %s49
    %s50 = sphi 0, %s47
    %s51 = sphi 0, %s50
    %s67 = sphi 0, %s51
    %s73 = sphi 0, %s75
    %s76 = sphi 0, %s73
    %s77 = sphi 0, %s76
    %s93 = sphi 0, %s77
    %s97 = sphi 0, %s97
    %s99 = sphi 0, %s97
    %s100 = sphi 0, %s99
    %s114 = sphi 0, %s100
    %s118 = sphi 0, %s118
    %s120 = sphi 0, %s118
    %s121 = sphi 0, %s120
    %s135 = sphi 0, %s121
    %s141 = sphi 0, %s143
    %s144 = sphi 0, %s141
    %s145 = sphi 0, %s144
    %s161 = sphi 0, %s145
  $region4: #{fourier_kernel_forward.1} parent=0 // loop_header_branch
    %14 = sbr.rel (%p12) target = $region8
  $region5: #{fourier_kernel_forward.1} parent=0 // loop_body
    %s16 = ssub.s32 %s11, 1
    %s17 = ssub.s32 %s11, 2
    %s18 = sadd.s32 %s11, 1
    %s19 = ssub.s32 %s11, %s18
    %p20 = scmp.eq.s32.totalorder %s19, 0
    %s22 = sadd.s32 %s21, 1
    %s23 = scalar_select %p20, %s21, %s22
    %p26 = pneg %p20
    %p27 = scmp.eq.s32.totalorder %s11, 1
    %p28 = por %p26, %p27
    %p29 = scmp.ne.s32.totalorder %s21, %s24
    %p30 = scmp.eq.s32.totalorder %s11, 0
    %p31 = por %p29, %p30
    %p32 = scmp.ne.s32.totalorder %s21, %s24
    %p33 = scmp.eq.s32.totalorder %s16, 1
    %p34 = por %p32, %p33
    %p35 = scmp.ne.s32.totalorder %s24, %s25
    %p36 = scmp.eq.s32.totalorder %s16, 0
    %p37 = por %p35, %p36
    %p38 = scmp.ne.s32.totalorder %s24, %s25
    %p39 = scmp.eq.s32.totalorder %s17, 1
    %p40 = por %p38, %p39
    %p42 = scmp.ne.s32.totalorder %s25, %s41
    %p43 = scmp.eq.s32.totalorder %s17, 0
    %p44 = por %p42, %p43
    %s45 = ssub.s32 %s11, %s18
    %p46 = scmp.eq.s32.totalorder %s45, 0
    %s48 = sadd.s32 %s47, 1
    %s49 = scalar_select %p46, %s47, %s48
    %p52 = pneg %p46
    %p53 = scmp.eq.s32.totalorder %s11, 1
    %p54 = por %p52, %p53
    %p55 = scmp.ne.s32.totalorder %s47, %s50
    %p56 = scmp.eq.s32.totalorder %s11, 0
    %p57 = por %p55, %p56
    %p58 = scmp.ne.s32.totalorder %s47, %s50
    %p59 = scmp.eq.s32.totalorder %s16, 1
    %p60 = por %p58, %p59
    %p61 = scmp.ne.s32.totalorder %s50, %s51
    %p62 = scmp.eq.s32.totalorder %s16, 0
    %p63 = por %p61, %p62
    %p64 = scmp.ne.s32.totalorder %s50, %s51
    %p65 = scmp.eq.s32.totalorder %s17, 1
    %p66 = por %p64, %p65
    %p68 = scmp.ne.s32.totalorder %s51, %s67
    %p69 = scmp.eq.s32.totalorder %s17, 0
    %p70 = por %p68, %p69
    %s71 = ssub.s32 %s11, %s18
    %p72 = scmp.eq.s32.totalorder %s71, 0
    %s74 = sadd.s32 %s73, 1
    %s75 = scalar_select %p72, %s73, %s74
    %p78 = pneg %p72
    %p79 = scmp.eq.s32.totalorder %s11, 1
    %p80 = por %p78, %p79
    %p81 = scmp.ne.s32.totalorder %s73, %s76
    %p82 = scmp.eq.s32.totalorder %s11, 0
    %p83 = por %p81, %p82
    %p84 = scmp.ne.s32.totalorder %s73, %s76
    %p85 = scmp.eq.s32.totalorder %s16, 1
    %p86 = por %p84, %p85
    %p87 = scmp.ne.s32.totalorder %s76, %s77
    %p88 = scmp.eq.s32.totalorder %s16, 0
    %p89 = por %p87, %p88
    %p90 = scmp.ne.s32.totalorder %s76, %s77
    %p91 = scmp.eq.s32.totalorder %s17, 1
    %p92 = por %p90, %p91
    %p94 = scmp.ne.s32.totalorder %s77, %s93
    %p95 = scmp.eq.s32.totalorder %s17, 0
    %p96 = por %p94, %p95
    %s98 = sadd.s32 %s97, 1
    %p101 = scmp.eq.s32.totalorder %s11, 1
    %p102 = scmp.ne.s32.totalorder %s97, %s99
    %p103 = scmp.eq.s32.totalorder %s11, 0
    %p104 = por %p102, %p103
    %p105 = scmp.ne.s32.totalorder %s97, %s99
    %p106 = scmp.eq.s32.totalorder %s16, 1
    %p107 = por %p105, %p106
    %p108 = scmp.ne.s32.totalorder %s99, %s100
    %p109 = scmp.eq.s32.totalorder %s16, 0
    %p110 = por %p108, %p109
    %p111 = scmp.ne.s32.totalorder %s99, %s100
    %p112 = scmp.eq.s32.totalorder %s17, 1
    %p113 = por %p111, %p112
    %p115 = scmp.ne.s32.totalorder %s100, %s114
    %p116 = scmp.eq.s32.totalorder %s17, 0
    %p117 = por %p115, %p116
    %s119 = sadd.s32 %s118, 1
    %p122 = scmp.eq.s32.totalorder %s11, 1
    %p123 = scmp.ne.s32.totalorder %s118, %s120
    %p124 = scmp.eq.s32.totalorder %s11, 0
    %p125 = por %p123, %p124
    %p126 = scmp.ne.s32.totalorder %s118, %s120
    %p127 = scmp.eq.s32.totalorder %s16, 1
    %p128 = por %p126, %p127
    %p129 = scmp.ne.s32.totalorder %s120, %s121
    %p130 = scmp.eq.s32.totalorder %s16, 0
    %p131 = por %p129, %p130
    %p132 = scmp.ne.s32.totalorder %s120, %s121
    %p133 = scmp.eq.s32.totalorder %s17, 1
    %p134 = por %p132, %p133
    %p136 = scmp.ne.s32.totalorder %s121, %s135
    %p137 = scmp.eq.s32.totalorder %s17, 0
    %p138 = por %p136, %p137
    %s139 = ssub.s32 %s11, %s18
    %p140 = scmp.eq.s32.totalorder %s139, 0
    %s142 = sadd.s32 %s141, 1
    %s143 = scalar_select %p140, %s141, %s142
    %p146 = pneg %p140
    %p147 = scmp.eq.s32.totalorder %s11, 1
    %p148 = por %p146, %p147
    %p149 = scmp.ne.s32.totalorder %s141, %s144
    %p150 = scmp.eq.s32.totalorder %s11, 0
    %p151 = por %p149, %p150
    %p152 = scmp.ne.s32.totalorder %s141, %s144
    %p153 = scmp.eq.s32.totalorder %s16, 1
    %p154 = por %p152, %p153
    %p155 = scmp.ne.s32.totalorder %s144, %s145
    %p156 = scmp.eq.s32.totalorder %s16, 0
    %p157 = por %p155, %p156
    %p158 = scmp.ne.s32.totalorder %s144, %s145
    %p159 = scmp.eq.s32.totalorder %s17, 1
    %p160 = por %p158, %p159
    %p162 = scmp.ne.s32.totalorder %s145, %s161
    %p163 = scmp.eq.s32.totalorder %s17, 0
    %p164 = por %p162, %p163
    %p165 = scmp.le.s32.totalorder 1, %s11
    %p166 = scmp.lt.s32.totalorder %s11, 3
    %p167 = pnand %p165, %p166
    %p168 = pneg %p167
    // Predicated region
    $region9: #{fourier_kernel_forward.1} parent=5 // pred_check
      _
    $region10: #{fourier_kernel_forward.1} parent=5 // pred_check_branch
      %170 = sbr.rel (%p167) target = $region12
    $region11: #{fourier_kernel_forward.1} parent=5 // pred_region
      %s171 = ssub.s32 %s11, 1
      // Predicated region
      $region13: #{fourier_kernel_forward.1} parent=11 // pred_check
        %p172 = pneg %p110
      $region14: #{fourier_kernel_forward.1} parent=11 // pred_check_branch
        %174 = sbr.rel (%p172) target = $region16
      $region15: #{fourier_kernel_forward.1} parent=11 // pred_region
        _
      $region16: #{fourier_kernel_forward.1} parent=11 // pred_fallthru
        _
      // Predicated region
      $region17: #{fourier_kernel_forward.1} parent=11 // pred_check
        %p175 = pneg %p131
      $region18: #{fourier_kernel_forward.1} parent=11 // pred_check_branch
        %177 = sbr.rel (%p175) target = $region20
      $region19: #{fourier_kernel_forward.1} parent=11 // pred_region
        _
      $region20: #{fourier_kernel_forward.1} parent=11 // pred_fallthru
        _
    $region12: #{fourier_kernel_forward.1} parent=5 // pred_fallthru
      _
    %p178 = scmp.lt.s32.totalorder %s11, 2
    // Predicated region
    $region21: #{fourier_kernel_forward.1} parent=5 // pred_check
      %p179 = pneg %p178
    $region22: #{fourier_kernel_forward.1} parent=5 // pred_check_branch
      %181 = sbr.rel (%p179) target = $region24
    $region23: #{fourier_kernel_forward.1} parent=5 // pred_region
      // Predicated region
      $region25: #{fourier_kernel_forward.1} parent=23 // pred_check
        %p182 = pneg %p31
      $region26: #{fourier_kernel_forward.1} parent=23 // pred_check_branch
        %184 = sbr.rel (%p182) target = $region28
      $region27: #{fourier_kernel_forward.1} parent=23 // pred_region
        %p185 = scmp.lt.s32.totalorder %s11, 1
        %s186 = scalar_select %p185, %s11, 1
        %s187 = smul.addr %s186, 4
        %s188 = scalar_lea.vmem %s0, %s187
      $region28: #{fourier_kernel_forward.1} parent=23 // pred_fallthru
        _
      // Predicated region
      $region29: #{fourier_kernel_forward.1} parent=23 // pred_check
        %p189 = pneg %p57
      $region30: #{fourier_kernel_forward.1} parent=23 // pred_check_branch
        %191 = sbr.rel (%p189) target = $region32
      $region31: #{fourier_kernel_forward.1} parent=23 // pred_region
        %p192 = scmp.lt.s32.totalorder %s11, 1
        %s193 = scalar_select %p192, %s11, 1
        %s194 = smul.addr %s193, 6
        %s195 = smul.addr %s194, 4
        %s196 = scalar_lea.vmem %s1, %s195
      $region32: #{fourier_kernel_forward.1} parent=23 // pred_fallthru
        _
      // Predicated region
      $region33: #{fourier_kernel_forward.1} parent=23 // pred_check
        %p197 = pneg %p83
      $region34: #{fourier_kernel_forward.1} parent=23 // pred_check_branch
        %199 = sbr.rel (%p197) target = $region36
      $region35: #{fourier_kernel_forward.1} parent=23 // pred_region
        %p200 = scmp.lt.s32.totalorder %s11, 1
        %s201 = scalar_select %p200, %s11, 1
        %s202 = smul.addr %s201, 6
        %s203 = smul.addr %s202, 4
        %s204 = scalar_lea.vmem %s2, %s203
      $region36: #{fourier_kernel_forward.1} parent=23 // pred_fallthru
        _
    $region24: #{fourier_kernel_forward.1} parent=5 // pred_fallthru
      _
    %p205 = scmp.le.s32.totalorder 1, %s11
    %p206 = scmp.lt.s32.totalorder %s11, 3
    %p207 = pnand %p205, %p206
    %p208 = pneg %p207
    // Predicated region
    $region37: #{fourier_kernel_forward.1} parent=5 // pred_check
      _
    $region38: #{fourier_kernel_forward.1} parent=5 // pred_check_branch
      %210 = sbr.rel (%p207) target = $region40
    $region39: #{fourier_kernel_forward.1} parent=5 // pred_region
      %s211 = ssub.s32 %s11, 1
      %p212 = scmp.lt.s32.totalorder %s16, 1
      %s213 = scalar_select %p212, %s16, 1
      %s214 = smul.addr %s213, 4
      %s215 = scalar_lea.vmem %s0, %s214
      %p216 = pneg %p37
      %p217 = pneg %p34
      %p218 = scmp.lt.s32.totalorder %s16, 1
      %s219 = scalar_select %p218, %s16, 1
      %s220 = smul.addr %s219, 6
      %s221 = smul.addr %s220, 4
      %s222 = scalar_lea.vmem %s1, %s221
      %p223 = pneg %p63
      %p224 = pneg %p60
      %p225 = scmp.lt.s32.totalorder %s16, 1
      %s226 = scalar_select %p225, %s16, 1
      %s227 = smul.addr %s226, 6
      %s228 = smul.addr %s227, 4
      %s229 = scalar_lea.vmem %s2, %s228
      %p230 = pneg %p89
      %p231 = pneg %p86
      %p232 = pneg %p110
      %p233 = pneg %p107
      %p234 = pneg %p131
      %p235 = pneg %p128
      %p236 = pneg %p157
      %p237 = pneg %p154
      %p238 = scmp.lt.s32.totalorder %s16, 1
      %s239 = scalar_select %p238, %s16, 1
      %s240 = smul.addr %s239, 8
      %s241 = scalar_lea.vmem %s5, %s240
      %p242 = scmp.lt.s32.totalorder %s16, 1
      %s243 = scalar_select %p242, %s16, 1
      %s244 = smul.addr %s243, 4
      %s245 = scalar_lea.vmem %s0, %s244
      %p246 = scmp.lt.s32.totalorder %s16, 1
      %s247 = scalar_select %p246, %s16, 1
      %s248 = smul.addr %s247, 6
      %s249 = smul.addr %s248, 4
      %s250 = scalar_lea.vmem %s1, %s249
      %p251 = scmp.lt.s32.totalorder %s16, 1
      %s252 = scalar_select %p251, %s16, 1
      %s253 = smul.addr %s252, 6
      %s254 = smul.addr %s253, 4
      %s255 = scalar_lea.vmem %s2, %s254
      %p256 = scmp.lt.s32.totalorder %s16, 1
      %s257 = scalar_select %p256, %s16, 1
      %s258 = smul.addr %s257, 8
      %s259 = scalar_lea.vmem %s5, %s258
      %v260 = vld [vmem:[%s245] sm:$0xf]
      %v261 = vld [vmem:[%s3] sm:$0xff]
      %v262 = vld [vmem:[%s3 + $0x8] sm:$0xff]
      %v263 = vld [vmem:[%s3 + $0x10] sm:$0xff]
      %v264 = vld [vmem:[%s3 + $0x18] sm:$0xff]
      %vm265 = vcmask 130048
      %v267 = vsel %vm265, %v260, 0
      %269 = vmatprep.subr.mxu0 %v262
      %270 = vmatpush1.msra.mxu0 %v261
      %271 = vmatprep.subr.mxu0 %v264
      %272 = vmatpush1.msra.mxu0 %v263
      %273 = vmatprep.subr.mxu0 0.0
      %274 = vmatpush1.msra.mxu0 0.0
      %275 = vmatprep.subr.mxu0 0.0
      %276 = vmatpush1.msra.mxu0 0.0
      %277 = vmatprep.subr.mxu0 0.0
      %278 = vmatpush1.msra.mxu0 0.0
      %279 = vmatprep.subr.mxu0 0.0
      %280 = vmatpush1.msra.mxu0 0.0
      %281 = vmatprep.subr.mxu0 0.0
      %282 = vmatpush1.msra.mxu0 0.0
      %283 = vmatprep.subr.mxu0 0.0
      %284 = vmatpush1.msra.mxu0 0.0
      %285 = vmatprep.subr.mxu0 0.0
      %286 = vmatpush1.msra.mxu0 0.0
      %287 = vmatprep.subr.mxu0 0.0
      %288 = vmatpush1.msra.mxu0 0.0
      %289 = vmatprep.subr.mxu0 0.0
      %290 = vmatpush1.msra.mxu0 0.0
      %291 = vmatprep.subr.mxu0 0.0
      %292 = vmatpush1.msra.mxu0 0.0
      %293 = vmatprep.subr.mxu0 0.0
      %294 = vmatpush1.msra.mxu0 0.0
      %295 = vmatprep.subr.mxu0 0.0
      %296 = vmatpush1.msra.mxu0 0.0
      %297 = vmatprep.subr.mxu0 0.0
      %298 = vmatpush1.msra.mxu0 0.0
      %299 = vmatprep.subr.mxu0 0.0
      %300 = vmatpush1.msra.mxu0 0.0
      %301 = vmatprep.subr.mxu0 0.0
      %302 = vmatpush1.msra.mxu0 0.0
      %303 = vmatprep.subr.mxu0 0.0
      %304 = vmatpush1.msra.mxu0 0.0
      %305 = vmatprep.subr.mxu0 0.0
      %306 = vmatpush1.msra.mxu0 0.0
      %307 = vmatprep.subr.mxu0 0.0
      %308 = vmatpush1.msra.mxu0 0.0
      %309 = vmatprep.subr.mxu0 0.0
      %310 = vmatpush1.msra.mxu0 0.0
      %311 = vmatprep.subr.mxu0 0.0
      %312 = vmatpush1.msra.mxu0 0.0
      %313 = vmatprep.subr.mxu0 0.0
      %314 = vmatpush1.msra.mxu0 0.0
      %315 = vmatprep.subr.mxu0 0.0
      %316 = vmatpush1.msra.mxu0 0.0
      %317 = vmatprep.subr.mxu0 0.0
      %318 = vmatpush1.msra.mxu0 0.0
      %319 = vmatprep.subr.mxu0 0.0
      %320 = vmatpush1.msra.mxu0 0.0
      %321 = vmatprep.subr.mxu0 0.0
      %322 = vmatpush1.msra.mxu0 0.0
      %323 = vmatprep.subr.mxu0 0.0
      %324 = vmatpush1.msra.mxu0 0.0
      %325 = vmatprep.subr.mxu0 0.0
      %326 = vmatpush1.msra.mxu0 0.0
      %327 = vmatprep.subr.mxu0 0.0
      %328 = vmatpush1.msra.mxu0 0.0
      %329 = vmatprep.subr.mxu0 0.0
      %330 = vmatpush1.msra.mxu0 0.0
      %331 = vmatprep.subr.mxu0 0.0
      %332 = vmatpush1.msra.mxu0 0.0
      %333 = vmatprep.mubr.f32.mxu0 0.0
      %334 = vmatmul.mubr.f32.gmra.mrb[0].mxu0 %v267
      %v335 = vpop.f32.mrb[0].mxu0
      %v336 = vadd.f32 0.0, %v335
      %v337 = vpop.f32.mrb[0].mxu0
      %v338 = vadd.f32 0.0, %v337
      %339 = vdwg.mxu0
      %v342 = vcombine.low %v336, %v338
      %344 = vst [vmem:[#allocation2] sm:$0xff] %v342
      %345 = vst [vmem:[#allocation3] sm:$0x3f] 0.0
      %346 = vst [vmem:[#allocation3 + $0x8] sm:$0x3f] 0.0
      %v347 = vld [vmem:[#allocation2] sm:$0xf]
      %v348 = vld [vmem:[#allocation2 + $0x4] sm:$0xf]
      %v349 = vld [vmem:[%s250] sm:$0xf]
      %v350 = vld [vmem:[%s250 + $0x4] sm:$0xf]
      %v351 = vld [vmem:[%s250 + $0x8] sm:$0xf]
      %v352 = vld [vmem:[%s250 + $0xc] sm:$0xf]
      %v353 = vld [vmem:[%s250 + $0x10] sm:$0xf]
      %v354 = vld [vmem:[%s250 + $0x14] sm:$0xf]
      %v355 = vld [vmem:[%s255] sm:$0xf]
      %v356 = vld [vmem:[%s255 + $0x4] sm:$0xf]
      %v357 = vld [vmem:[%s255 + $0x8] sm:$0xf]
      %v358 = vld [vmem:[%s255 + $0xc] sm:$0xf]
      %v359 = vld [vmem:[%s255 + $0x10] sm:$0xf]
      %v360 = vld [vmem:[%s255 + $0x14] sm:$0xf]
      %v361 = vmul.f32 %v347, %v349
      %v362 = vmul.f32 %v347, %v350
      %v363 = vmul.f32 %v347, %v351
      %v364 = vmul.f32 %v347, %v352
      %v365 = vmul.f32 %v347, %v353
      %v366 = vmul.f32 %v347, %v354
      %v367 = vmul.f32 %v348, %v355
      %v368 = vmul.f32 %v348, %v356
      %v369 = vmul.f32 %v348, %v357
      %v370 = vmul.f32 %v348, %v358
      %v371 = vmul.f32 %v348, %v359
      %v372 = vmul.f32 %v348, %v360
      %v373 = vsub.f32 %v361, %v367
      %v374 = vsub.f32 %v362, %v368
      %v375 = vsub.f32 %v363, %v369
      %v376 = vsub.f32 %v364, %v370
      %v377 = vsub.f32 %v365, %v371
      %v378 = vsub.f32 %v366, %v372
      %vm379 = vcmask 35840
      %v380 = vsel %vm379, %v373, 0.0
      %v381 = vrot.slane %v380, 4
      %v382 = vadd.f32 %v380, %v381
      %v383 = vrot.slane %v382, 2
      %v384 = vadd.f32 %v382, %v383
      %v385 = vrot.slane %v384, 1
      %v386 = vadd.f32 %v384, %v385
      %v387 = vsel %vm379, %v374, 0.0
      %v388 = vrot.slane %v387, 4
      %v389 = vadd.f32 %v387, %v388
      %v390 = vrot.slane %v389, 2
      %v391 = vadd.f32 %v389, %v390
      %v392 = vrot.slane %v391, 1
      %v393 = vadd.f32 %v391, %v392
      %v394 = vsel %vm379, %v375, 0.0
      %v395 = vrot.slane %v394, 4
      %v396 = vadd.f32 %v394, %v395
      %v397 = vrot.slane %v396, 2
      %v398 = vadd.f32 %v396, %v397
      %v399 = vrot.slane %v398, 1
      %v400 = vadd.f32 %v398, %v399
      %v401 = vsel %vm379, %v376, 0.0
      %v402 = vrot.slane %v401, 4
      %v403 = vadd.f32 %v401, %v402
      %v404 = vrot.slane %v403, 2
      %v405 = vadd.f32 %v403, %v404
      %v406 = vrot.slane %v405, 1
      %v407 = vadd.f32 %v405, %v406
      %v408 = vsel %vm379, %v377, 0.0
      %v409 = vrot.slane %v408, 4
      %v410 = vadd.f32 %v408, %v409
      %v411 = vrot.slane %v410, 2
      %v412 = vadd.f32 %v410, %v411
      %v413 = vrot.slane %v412, 1
      %v414 = vadd.f32 %v412, %v413
      %v415 = vsel %vm379, %v378, 0.0
      %v416 = vrot.slane %v415, 4
      %v417 = vadd.f32 %v415, %v416
      %v418 = vrot.slane %v417, 2
      %v419 = vadd.f32 %v417, %v418
      %v420 = vrot.slane %v419, 1
      %v421 = vadd.f32 %v419, %v420
      %v422 = vadd.f32 %v386, 0.0
      %v423 = vadd.f32 %v393, 0.0
      %v424 = vadd.f32 %v400, 0.0
      %v425 = vadd.f32 %v407, 0.0
      %v426 = vadd.f32 %v414, 0.0
      %v427 = vadd.f32 %v421, 0.0
      %v428 = vmul.f32 %v347, %v355
      %v429 = vmul.f32 %v347, %v356
      %v430 = vmul.f32 %v347, %v357
      %v431 = vmul.f32 %v347, %v358
      %v432 = vmul.f32 %v347, %v359
      %v433 = vmul.f32 %v347, %v360
      %v434 = vmul.f32 %v348, %v349
      %v435 = vmul.f32 %v348, %v350
      %v436 = vmul.f32 %v348, %v351
      %v437 = vmul.f32 %v348, %v352
      %v438 = vmul.f32 %v348, %v353
      %v439 = vmul.f32 %v348, %v354
      %v440 = vadd.f32 %v428, %v434
      %v441 = vadd.f32 %v429, %v435
      %v442 = vadd.f32 %v430, %v436
      %v443 = vadd.f32 %v431, %v437
      %v444 = vadd.f32 %v432, %v438
      %v445 = vadd.f32 %v433, %v439
      %v446 = vsel %vm379, %v440, 0.0
      %v447 = vrot.slane %v446, 4
      %v448 = vadd.f32 %v446, %v447
      %v449 = vrot.slane %v448, 2
      %v450 = vadd.f32 %v448, %v449
      %v451 = vrot.slane %v450, 1
      %v452 = vadd.f32 %v450, %v451
      %v453 = vsel %vm379, %v441, 0.0
      %v454 = vrot.slane %v453, 4
      %v455 = vadd.f32 %v453, %v454
      %v456 = vrot.slane %v455, 2
      %v457 = vadd.f32 %v455, %v456
      %v458 = vrot.slane %v457, 1
      %v459 = vadd.f32 %v457, %v458
      %v460 = vsel %vm379, %v442, 0.0
      %v461 = vrot.slane %v460, 4
      %v462 = vadd.f32 %v460, %v461
      %v463 = vrot.slane %v462, 2
      %v464 = vadd.f32 %v462, %v463
      %v465 = vrot.slane %v464, 1
      %v466 = vadd.f32 %v464, %v465
      %v467 = vsel %vm379, %v443, 0.0
      %v468 = vrot.slane %v467, 4
      %v469 = vadd.f32 %v467, %v468
      %v470 = vrot.slane %v469, 2
      %v471 = vadd.f32 %v469, %v470
      %v472 = vrot.slane %v471, 1
      %v473 = vadd.f32 %v471, %v472
      %v474 = vsel %vm379, %v444, 0.0
      %v475 = vrot.slane %v474, 4
      %v476 = vadd.f32 %v474, %v475
      %v477 = vrot.slane %v476, 2
      %v478 = vadd.f32 %v476, %v477
      %v479 = vrot.slane %v478, 1
      %v480 = vadd.f32 %v478, %v479
      %v481 = vsel %vm379, %v445, 0.0
      %v482 = vrot.slane %v481, 4
      %v483 = vadd.f32 %v481, %v482
      %v484 = vrot.slane %v483, 2
      %v485 = vadd.f32 %v483, %v484
      %v486 = vrot.slane %v485, 1
      %v487 = vadd.f32 %v485, %v486
      %v488 = vadd.f32 %v452, 0.0
      %v489 = vadd.f32 %v459, 0.0
      %v490 = vadd.f32 %v466, 0.0
      %v491 = vadd.f32 %v473, 0.0
      %v492 = vadd.f32 %v480, 0.0
      %v493 = vadd.f32 %v487, 0.0
      %vm500 = vcmask 1041409
      %v501 = vsel %vm500, %v423, %v422
      %vm502 = vcmask 1042434
      %v503 = vsel %vm502, %v424, %v501
      %vm504 = vcmask 1043459
      %v505 = vsel %vm504, %v425, %v503
      %vm506 = vcmask 1044484
      %v507 = vsel %vm506, %v426, %v505
      %vm508 = vcmask 1045509
      %v509 = vsel %vm508, %v427, %v507
      %vm511 = vcmask 37888
      %512 = vst.msk [vmem:[#allocation3] sm:$0x3f] %vm511, %v509
      %v519 = vsel %vm500, %v489, %v488
      %v520 = vsel %vm502, %v490, %v519
      %v521 = vsel %vm504, %v491, %v520
      %v522 = vsel %vm506, %v492, %v521
      %v523 = vsel %vm508, %v493, %v522
      %525 = vst.msk [vmem:[#allocation3 + $0x8] sm:$0x3f] %vm511, %v523
      %v526 = vld [vmem:[#allocation3] sm:$0x3f]
      %v527 = vld [vmem:[#allocation3 + $0x8] sm:$0x3f]
      %v528 = vld [vmem:[%s4] sm:$0xff]
      %v529 = vld [vmem:[%s4 + $0x8] sm:$0xff]
      %v530 = vld [vmem:[%s4 + $0x10] sm:$0xff]
      %v531 = vld [vmem:[%s4 + $0x18] sm:$0xff]
      %v532 = vld [vmem:[%s4 + $0x20] sm:$0xff]
      %v533 = vld [vmem:[%s4 + $0x28] sm:$0xff]
      %v534 = vld [vmem:[%s4 + $0x30] sm:$0xff]
      %v535 = vld [vmem:[%s4 + $0x38] sm:$0xff]
      %v536 = vld [vmem:[%s4 + $0x40] sm:$0xff]
      %v537 = vld [vmem:[%s4 + $0x48] sm:$0xff]
      %v538 = vld [vmem:[%s4 + $0x50] sm:$0xff]
      %v539 = vld [vmem:[%s4 + $0x58] sm:$0xff]
      %v540 = vld [vmem:[%s4 + $0x60] sm:$0xff]
      %v541 = vld [vmem:[%s4 + $0x68] sm:$0xff]
      %v542 = vld [vmem:[%s4 + $0x70] sm:$0xff]
      %v543 = vld [vmem:[%s4 + $0x78] sm:$0xff]
      %v544 = vld [vmem:[%s4 + $0x80] sm:$0xff]
      %v545 = vld [vmem:[%s4 + $0x88] sm:$0xff]
      %v546 = vld [vmem:[%s4 + $0x90] sm:$0xff]
      %v547 = vld [vmem:[%s4 + $0x98] sm:$0xff]
      %v548 = vld [vmem:[%s4 + $0xa0] sm:$0xff]
      %v549 = vld [vmem:[%s4 + $0xa8] sm:$0xff]
      %v550 = vld [vmem:[%s4 + $0xb0] sm:$0xff]
      %v551 = vld [vmem:[%s4 + $0xb8] sm:$0xff]
      %v552 = vld [vmem:[%s4 + $0xc0] sm:$0xff]
      %v553 = vld [vmem:[%s4 + $0xc8] sm:$0xff]
      %v554 = vld [vmem:[%s4 + $0xd0] sm:$0xff]
      %v555 = vld [vmem:[%s4 + $0xd8] sm:$0xff]
      %v556 = vld [vmem:[%s4 + $0xe0] sm:$0xff]
      %v557 = vld [vmem:[%s4 + $0xe8] sm:$0xff]
      %v558 = vld [vmem:[%s4 + $0xf0] sm:$0xff]
      %v559 = vld [vmem:[%s4 + $0xf8] sm:$0xff]
      %560 = vmatprep.subr.mxu0 0.0
      %561 = vmatpush1.msra.mxu0 %v528
      %562 = vmatprep.subr.mxu0 0.0
      %563 = vmatpush1.msra.mxu0 %v529
      %564 = vmatprep.subr.mxu0 0.0
      %565 = vmatpush1.msra.mxu0 %v530
      %566 = vmatprep.subr.mxu0 0.0
      %567 = vmatpush1.msra.mxu0 %v531
      %568 = vmatprep.subr.mxu0 0.0
      %569 = vmatpush1.msra.mxu0 %v532
      %570 = vmatprep.subr.mxu0 0.0
      %571 = vmatpush1.msra.mxu0 %v533
      %572 = vmatprep.subr.mxu0 0.0
      %573 = vmatpush1.msra.mxu0 %v534
      %574 = vmatprep.subr.mxu0 0.0
      %575 = vmatpush1.msra.mxu0 %v535
      %576 = vmatprep.subr.mxu0 0.0
      %577 = vmatpush1.msra.mxu0 %v536
      %578 = vmatprep.subr.mxu0 0.0
      %579 = vmatpush1.msra.mxu0 %v537
      %580 = vmatprep.subr.mxu0 0.0
      %581 = vmatpush1.msra.mxu0 %v538
      %582 = vmatprep.subr.mxu0 0.0
      %583 = vmatpush1.msra.mxu0 %v539
      %584 = vmatprep.subr.mxu0 0.0
      %585 = vmatpush1.msra.mxu0 %v540
      %586 = vmatprep.subr.mxu0 0.0
      %587 = vmatpush1.msra.mxu0 %v541
      %588 = vmatprep.subr.mxu0 0.0
      %589 = vmatpush1.msra.mxu0 %v542
      %590 = vmatprep.subr.mxu0 0.0
      %591 = vmatpush1.msra.mxu0 %v543
      %592 = vmatprep.subr.mxu0 0.0
      %593 = vmatpush1.msra.mxu0 %v544
      %594 = vmatprep.subr.mxu0 0.0
      %595 = vmatpush1.msra.mxu0 %v545
      %596 = vmatprep.subr.mxu0 0.0
      %597 = vmatpush1.msra.mxu0 %v546
      %598 = vmatprep.subr.mxu0 0.0
      %599 = vmatpush1.msra.mxu0 %v547
      %600 = vmatprep.subr.mxu0 0.0
      %601 = vmatpush1.msra.mxu0 %v548
      %602 = vmatprep.subr.mxu0 0.0
      %603 = vmatpush1.msra.mxu0 %v549
      %604 = vmatprep.subr.mxu0 0.0
      %605 = vmatpush1.msra.mxu0 %v550
      %606 = vmatprep.subr.mxu0 0.0
      %607 = vmatpush1.msra.mxu0 %v551
      %608 = vmatprep.subr.mxu0 0.0
      %609 = vmatpush1.msra.mxu0 %v552
      %610 = vmatprep.subr.mxu0 0.0
      %611 = vmatpush1.msra.mxu0 %v553
      %612 = vmatprep.subr.mxu0 0.0
      %613 = vmatpush1.msra.mxu0 %v554
      %614 = vmatprep.subr.mxu0 0.0
      %615 = vmatpush1.msra.mxu0 %v555
      %616 = vmatprep.subr.mxu0 0.0
      %617 = vmatpush1.msra.mxu0 %v556
      %618 = vmatprep.subr.mxu0 0.0
      %619 = vmatpush1.msra.mxu0 %v557
      %620 = vmatprep.subr.mxu0 0.0
      %621 = vmatpush1.msra.mxu0 %v558
      %622 = vmatprep.subr.mxu0 0.0
      %623 = vmatpush1.msra.mxu0 %v559
      %624 = vmatprep.mubr.f32.mxu0 %v527
      %625 = vmatmul.mubr.f32.gmra.mrb[0].mxu0 %v526
      %v626 = vpop.f32.mrb[0].mxu0
      %v627 = vadd.f32 0.0, %v626
      %v628 = vpop.f32.mrb[0].mxu0
      %629 = vdwg.mxu0
      %vm630 = vcmask 128000
      %631 = vst.msk [vmem:[%s259] sm:$0x3f] %vm630, %v627
      %p632 = scmp.lt.s32.totalorder %s16, 1
      %s633 = scalar_select %p632, %s16, 1
      %s634 = smul.addr %s633, 8
      %s635 = scalar_lea.vmem %s5, %s634
      // Predicated region
      $region41: #{fourier_kernel_forward.1} parent=39 // pred_check
        %p636 = pneg %p154
      $region42: #{fourier_kernel_forward.1} parent=39 // pred_check_branch
        %638 = sbr.rel (%p636) target = $region44
      $region43: #{fourier_kernel_forward.1} parent=39 // pred_region
        _
      $region44: #{fourier_kernel_forward.1} parent=39 // pred_fallthru
        _
    $region40: #{fourier_kernel_forward.1} parent=5 // pred_fallthru
      _
    %p639 = scmp.le.s32.totalorder 2, %s11
    // Predicated region
    $region45: #{fourier_kernel_forward.1} parent=5 // pred_check
      %p640 = pneg %p639
    $region46: #{fourier_kernel_forward.1} parent=5 // pred_check_branch
      %642 = sbr.rel (%p640) target = $region48
    $region47: #{fourier_kernel_forward.1} parent=5 // pred_region
      %s643 = ssub.s32 %s11, 2
      // Predicated region
      $region49: #{fourier_kernel_forward.1} parent=47 // pred_check
        %p644 = pneg %p160
      $region50: #{fourier_kernel_forward.1} parent=47 // pred_check_branch
        %646 = sbr.rel (%p644) target = $region52
      $region51: #{fourier_kernel_forward.1} parent=47 // pred_region
        %p647 = scmp.lt.s32.totalorder %s17, 1
        %s648 = scalar_select %p647, %s17, 1
        %s649 = smul.addr %s648, 8
        %s650 = scalar_lea.vmem %s5, %s649
      $region52: #{fourier_kernel_forward.1} parent=47 // pred_fallthru
        _
    $region48: #{fourier_kernel_forward.1} parent=5 // pred_fallthru
      _
  $region6: #{fourier_kernel_forward.1} parent=0 // loop_footer
    %s15 = sadd.s32 1, %s11
  $region7: #{fourier_kernel_forward.1} parent=0 // loop_footer_branch
    %10 = sbr.rel target = $region3
  $region8: #{fourier_kernel_forward.1} parent=0 // loop_exit
    _

</llo_original>
